<compile_context>
chip_gen: v5e
topology: v5e:2x2
jax: 0.10.0
libtpu: 0.0.40
codegen_flags: <defaults>
</compile_context>

<pallas_src>
import functools

import jax
import jax.numpy as jnp
from jax.experimental import pallas as pl
from jax.experimental.pallas import tpu as pltpu

EPS = 1e-5
MOMENTUM = 0.9


# ---------------------------------------------------------------------------
# Generation-aware sizing.
# ---------------------------------------------------------------------------
def _vmem_capacity_bytes():
    """Physical VMEM per TensorCore (128 MiB v5e/v6e, 64 MiB v7x); falls back
    to the most conservative value (v7x) if the query is unavailable."""
    try:
        info = pltpu.get_tpu_info()
        for attr in ("vmem_capacity_bytes", "vmem_bytes", "vmem_size_bytes"):
            val = getattr(info, attr, None)
            if val:
                return int(val)
    except Exception:
        pass
    return 64 * 1024 * 1024


def _budgets():
    """(vmem capacity, per-block f32 working-set budget, scoped vmem limit)."""
    cap = _vmem_capacity_bytes()
    if cap >= 96 * 1024 * 1024:                       # v5e / v6e
        return cap, 8 * 1024 * 1024, 64 * 1024 * 1024
    return cap, 4 * 1024 * 1024, 48 * 1024 * 1024     # v7x (64 MiB per TC)


def _pick_tiling(N, C, HW, block_bytes):
    """Choose x block_shape = (n_blk, C, tile), sized by f32 working set.

    Keeps the last block dim either a multiple of 128 or the full HW extent
    (Mosaic (8,128) rule => lane-dense stores) and targets ~block_bytes per
    step so the ~0.35us/step overhead is amortized."""
    row_bytes = 4 * C * HW
    if row_bytes <= block_bytes:
        # Small spatial extent (incl. HW with no 128-multiple divisor): batch
        # several images per grid step instead of tiny, overhead-bound blocks.
        n_blk = min(N, max(1, block_bytes // row_bytes))
        while N % n_blk:
            n_blk -= 1
        return n_blk, HW
    if HW % 128 == 0:
        max_lanes = max(128, ((block_bytes // (4 * C)) // 128) * 128)
        t = min(max_lanes, HW)
        while t >= 128:
            if HW % t == 0:
                return 1, t
            t -= 128
    # TODO(synk): a single (1, C, HW) row above the block budget with no
    # 128-multiple divisor of HW (huge-C small-HW layers) would need ragged
    # last-tile masking or C-axis tiling; fall back to one full row per step.
    return 1, HW


def _acc_width(tile):
    """Lane width of the per-channel partial accumulators."""
    if tile % 128 == 0:
        return 128 if tile // 128 <= 256 else 1
    return tile if tile <= 512 else 1


def _fold_lanes(a, lw):
    """Fold (C, T) -> (C, lw) with unrolled lane-aligned vreg adds
    (T % lw == 0 by construction); lw == 1 uses a plain cross-lane reduce."""
    _, t = a.shape
    if lw == t:
        return a
    if lw == 1:
        return jnp.sum(a, axis=-1, keepdims=True)
    out = a[:, :lw]
    for j in range(1, t // lw):
        out = out + a[:, j * lw:(j + 1) * lw]
    return out


# ---------------------------------------------------------------------------
# Pass 1: per-N-block, per-channel partial sum / sum-of-squares.
# ---------------------------------------------------------------------------
def _stats_kernel(x_ref, psum_ref, pssq_ref, *, lw):
    # x_ref: (n_blk, C, tile).  psum/pssq: (1, C, lw) f32, resident across the
    # HW-tile ("arbitrary") axis; one slab per N-block so the N-block axis
    # stays "parallel" (megacore-shardable on multi-TC chips).
    t = pl.program_id(1)

    @pl.when(t == 0)
    def _init():
        psum_ref[...] = jnp.zeros_like(psum_ref)
        pssq_ref[...] = jnp.zeros_like(pssq_ref)

    x = x_ref[...].astype(jnp.float32)            # (n_blk, C, tile)
    s = jnp.sum(x, axis=0)                        # (C, tile)  plain vreg adds
    q = jnp.sum(x * x, axis=0)                    # (C, tile)
    psum_ref[...] += _fold_lanes(s, lw)[None]     # (1, C, lw)
    pssq_ref[...] += _fold_lanes(q, lw)[None]


# ---------------------------------------------------------------------------
# Pass 2: y = x * scale + shift   (per-channel scale/shift pre-folded).
# ---------------------------------------------------------------------------
def _norm_kernel(x_ref, scale_ref, shift_ref, y_ref):
    # TODO(synk): for bf16 inputs on v6e/v7x a native-bf16 FMA path would halve
    # the vreg footprint; f32 compute kept for v5e compatibility / accuracy.
    scale = scale_ref[...][None]                  # (1, C, 1)
    shift = shift_ref[...][None]
    y_ref[...] = (x_ref[...].astype(jnp.float32) * scale + shift).astype(y_ref.dtype)


# ---------------------------------------------------------------------------
# Fused single-read kernel (whole x resident in VMEM).
# ---------------------------------------------------------------------------
def _fused_kernel(x_ref, g_ref, b_ref, mm_ref, mv_ref,
                  y_ref, nmm_ref, nmv_ref, *, m_total, lw):
    x = x_ref[...].astype(jnp.float32)                      # (N, C, HW)
    s = _fold_lanes(jnp.sum(x, axis=0), lw)                 # (C, lw)
    q = _fold_lanes(jnp.sum(x * x, axis=0), lw)
    inv_m = jnp.float32(1.0 / m_total)
    mean = jnp.sum(s, axis=-1, keepdims=True) * inv_m       # (C, 1)
    var = jnp.sum(q, axis=-1, keepdims=True) * inv_m - mean * mean
    inv_std = jax.lax.rsqrt(var + EPS)
    scale = g_ref[...].astype(jnp.float32) * inv_std        # (C, 1)
    shift = b_ref[...].astype(jnp.float32) - mean * scale
    y_ref[...] = (x * scale[None] + shift[None]).astype(y_ref.dtype)
    nmm_ref[...] = (MOMENTUM * mm_ref[...].astype(jnp.float32)
                    + (1.0 - MOMENTUM) * mean)
    nmv_ref[...] = (MOMENTUM * mv_ref[...].astype(jnp.float32)
                    + (1.0 - MOMENTUM) * var)


def _finalize_stats(total_sum, total_ssq, gamma_c, beta_c, mm_c, mv_c, m_total):
    """Tiny per-channel finalize (plain JAX on (C,) vectors)."""
    inv_m = 1.0 / m_total
    mean = total_sum * inv_m
    # NOTE: E[x^2] - mean^2 with lane-parallel f32 partials; matches the
    # reference to ~1e-5 here.  A two-pass / Kahan variance would only be
    # needed for extreme |mean|/std ratios at very large N*H*W.
    var = total_ssq * inv_m - mean * mean
    inv_std = jax.lax.rsqrt(var + EPS)
    scale = gamma_c.astype(jnp.float32) * inv_std
    shift = beta_c.astype(jnp.float32) - mean * scale
    new_mm = MOMENTUM * mm_c.astype(jnp.float32) + (1.0 - MOMENTUM) * mean
    new_mv = MOMENTUM * mv_c.astype(jnp.float32) + (1.0 - MOMENTUM) * var
    return scale, shift, new_mm, new_mv


def batch_norm_pallas(x, gamma, beta, moving_mean, moving_var, *,
                      force_two_pass=False):
    """Training-mode BatchNorm forward for x: (N, C, H, W).

    gamma/beta/moving_*: (1, C, 1, 1).  Returns (y, new_moving_mean,
    new_moving_var); running stats are returned as float32 regardless of
    x.dtype.  Matches the d2l reference (biased batch variance; the
    momentum*old + (1-momentum)*new convention).
    """
    N, C, H, W = x.shape
    HW = H * W
    M = N * HW
    itemsize = jnp.dtype(x.dtype).itemsize
    cap, block_bytes, vmem_limit = _budgets()

    # Free, contiguous reshapes only — no HBM transpose traffic.
    x3 = x.reshape(N, C, HW)
    g2 = gamma.reshape(C, 1)
    b2 = beta.reshape(C, 1)
    mm2 = moving_mean.reshape(C, 1)
    mv2 = moving_var.reshape(C, 1)

    # ---- Fused single-read path: stats + normalize from one VMEM-resident
    # copy of x (x read once, y written once — vs 3x HBM traffic otherwise).
    if not force_two_pass and 4 * N * C * HW <= cap // 6:
        lw = _acc_width(HW)
        slab = pl.BlockSpec((N, C, HW), lambda i: (0, 0, 0))
        cvec = pl.BlockSpec((C, 1), lambda i: (0, 0))
        y3, nmm2, nmv2 = pl.pallas_call(
            functools.partial(_fused_kernel, m_total=float(M), lw=lw),
            out_shape=(jax.ShapeDtypeStruct((N, C, HW), x.dtype),
                       jax.ShapeDtypeStruct((C, 1), jnp.float32),
                       jax.ShapeDtypeStruct((C, 1), jnp.float32)),
            grid=(1,),
            in_specs=[slab, cvec, cvec, cvec, cvec],
            out_specs=(slab, cvec, cvec),
            compiler_params=pltpu.CompilerParams(
                dimension_semantics=("arbitrary",),
                vmem_limit_bytes=min((cap * 3) // 4, 96 * 1024 * 1024)),
            cost_estimate=pl.CostEstimate(
                flops=7 * C * M, transcendentals=C,
                bytes_accessed=2 * C * M * itemsize),
        )(x3, g2, b2, mm2, mv2)
        return (y3.reshape(N, C, H, W),
                nmm2.reshape(1, C, 1, 1), nmv2.reshape(1, C, 1, 1))

    # ---- Two-pass tiled path (HBM-sized inputs) ----
    n_blk, tile = _pick_tiling(N, C, HW, block_bytes)
    lw = _acc_width(tile)
    gn, gt = N // n_blk, HW // tile

    x_spec = pl.BlockSpec((n_blk, C, tile), lambda i, t: (i, 0, t))
    part_spec = pl.BlockSpec((1, C, lw), lambda i, t: (i, 0, 0))
    cvec = pl.BlockSpec((C, 1), lambda i, t: (0, 0))

    # Pass 1: per-N-block lane-parallel partial sums.  N axis "parallel"
    # (both TensorCores on v7x share the stats pass); HW-tile axis reduces.
    psum, pssq = pl.pallas_call(
        functools.partial(_stats_kernel, lw=lw),
        out_shape=(jax.ShapeDtypeStruct((gn, C, lw), jnp.float32),
                   jax.ShapeDtypeStruct((gn, C, lw), jnp.float32)),
        grid=(gn, gt),
        in_specs=[x_spec],
        out_specs=(part_spec, part_spec),
        compiler_params=pltpu.CompilerParams(
            dimension_semantics=("parallel", "arbitrary"),
            vmem_limit_bytes=vmem_limit),
        cost_estimate=pl.CostEstimate(
            flops=3 * C * M, transcendentals=0,
            bytes_accessed=C * M * itemsize + 8 * gn * C * lw),
    )(x3)

    # Tiny finalize in plain JAX: mean/var/rsqrt, gamma/beta folded into a
    # per-channel scale/shift, plus the running-stat update.
    total_sum = jnp.sum(psum, axis=(0, 2))
    total_ssq = jnp.sum(pssq, axis=(0, 2))
    scale_c, shift_c, nmm_c, nmv_c = _finalize_stats(
        total_sum, total_ssq, gamma.reshape(C), beta.reshape(C),
        moving_mean.reshape(C), moving_var.reshape(C), float(M))

    # Pass 2: y = x*scale + shift — pure elementwise, fully parallel (megacore).
    y3 = pl.pallas_call(
        _norm_kernel,
        out_shape=jax.ShapeDtypeStruct((N, C, HW), x.dtype),
        grid=(gn, gt),
        in_specs=[x_spec, cvec, cvec],
        out_specs=x_spec,
        compiler_params=pltpu.CompilerParams(
            dimension_semantics=("parallel", "parallel"),
            vmem_limit_bytes=vmem_limit),
        cost_estimate=pl.CostEstimate(
            flops=2 * C * M, transcendentals=0,
            bytes_accessed=2 * C * M * itemsize),
    )(x3, scale_c.reshape(C, 1), shift_c.reshape(C, 1))

    return (y3.reshape(N, C, H, W),
            nmm_c.reshape(1, C, 1, 1), nmv_c.reshape(1, C, 1, 1))


def batch_norm_ref(x, gamma, beta, moving_mean, moving_var):
    mean = jnp.mean(x, axis=(0, 2, 3), keepdims=True)
    var = jnp.mean((x - mean) ** 2, axis=(0, 2, 3), keepdims=True)
    y = gamma * (x - mean) / jnp.sqrt(var + EPS) + beta
    new_mm = MOMENTUM * moving_mean + (1.0 - MOMENTUM) * mean
    new_mv = MOMENTUM * moving_var + (1.0 - MOMENTUM) * var
    return y, new_mm, new_mv


# TODO(synk): eval-mode branch (normalize with moving stats, no update) and the
# 2-D fully-connected input path are trivial variants and are not kernelized;
# only the 4-D training-mode forward is.


if __name__ == "__main__":
    key = jax.random.PRNGKey(0)
    N, C, H, W = 2, 4, 16, 16
    x = jax.random.normal(key, (N, C, H, W), dtype=jnp.float32)

    # Deterministic parameter init per the module's __init__ (num_dims=4):
    gamma = jnp.ones((1, C, 1, 1), dtype=jnp.float32)
    beta = jnp.zeros((1, C, 1, 1), dtype=jnp.float32)
    moving_mean = jnp.zeros((1, C, 1, 1), dtype=jnp.float32)
    moving_var = jnp.ones((1, C, 1, 1), dtype=jnp.float32)

    bn = jax.jit(batch_norm_pallas, static_argnames=("force_two_pass",))
    y_ref, mm_ref, mv_ref = batch_norm_ref(x, gamma, beta, moving_mean, moving_var)

    # Fused single-read path (input fits in VMEM at this size).
    y, mm, mv = bn(x, gamma, beta, moving_mean, moving_var)
    jax.block_until_ready((y, mm, mv))
    assert jnp.allclose(y, y_ref, atol=1e-4, rtol=1e-4)
    assert jnp.allclose(mm, mm_ref, atol=1e-5, rtol=1e-5)
    assert jnp.allclose(mv, mv_ref, atol=1e-5, rtol=1e-5)

    # Two-pass tiled path (what HBM-sized inputs take); force it here to test.
    y2, mm2, mv2 = bn(x, gamma, beta, moving_mean, moving_var, force_two_pass=True)
    jax.block_until_ready((y2, mm2, mv2))
    assert jnp.allclose(y2, y_ref, atol=1e-4, rtol=1e-4)
    assert jnp.allclose(mm2, mm_ref, atol=1e-5, rtol=1e-5)
    assert jnp.allclose(mv2, mv_ref, atol=1e-5, rtol=1e-5)

    print("KERNEL_OK")
</pallas_src>

<mosaic_0001>
module attributes {stable_mosaic.version = 11 : i64} {
  func.func @_fused_kernel(%arg0: i32, %arg1: memref<2x4x256xf32, #tpu.memory_space<vmem>>, %arg2: memref<4x1xf32, #tpu.memory_space<vmem>>, %arg3: memref<4x1xf32, #tpu.memory_space<vmem>>, %arg4: memref<4x1xf32, #tpu.memory_space<vmem>>, %arg5: memref<4x1xf32, #tpu.memory_space<vmem>>, %arg6: memref<2x4x256xf32, #tpu.memory_space<vmem>>, %arg7: memref<4x1xf32, #tpu.memory_space<vmem>>, %arg8: memref<4x1xf32, #tpu.memory_space<vmem>>) attributes {dimension_semantics = [#tpu.dimension_semantics<arbitrary>], iteration_bounds = array<i64: 1>, scalar_prefetch = 0 : i64, scratch_operands = 0 : i64, tpu.core_type = #tpu.core_type<tc>, window_params = [{pipeline_mode = #tpu.pipeline_mode<synchronous>, transform_indices = @transform_0, window_bounds = array<i64: 2, 4, 256>}, {pipeline_mode = #tpu.pipeline_mode<synchronous>, transform_indices = @transform_1, window_bounds = array<i64: 4, 1>}, {pipeline_mode = #tpu.pipeline_mode<synchronous>, transform_indices = @transform_2, window_bounds = array<i64: 4, 1>}, {pipeline_mode = #tpu.pipeline_mode<synchronous>, transform_indices = @transform_3, window_bounds = array<i64: 4, 1>}, {pipeline_mode = #tpu.pipeline_mode<synchronous>, transform_indices = @transform_4, window_bounds = array<i64: 4, 1>}, {pipeline_mode = #tpu.pipeline_mode<synchronous>, transform_indices = @transform_5, window_bounds = array<i64: 2, 4, 256>}, {pipeline_mode = #tpu.pipeline_mode<synchronous>, transform_indices = @transform_6, window_bounds = array<i64: 4, 1>}, {pipeline_mode = #tpu.pipeline_mode<synchronous>, transform_indices = @transform_7, window_bounds = array<i64: 4, 1>}]} {
    %c0 = arith.constant 0 : index
    %c0_0 = arith.constant 0 : index
    %c0_1 = arith.constant 0 : index
    %0 = vector.load %arg1[%c0, %c0_0, %c0_1] : memref<2x4x256xf32, #tpu.memory_space<vmem>>, vector<2x4x256xf32>
    %cst = arith.constant dense<0.000000e+00> : vector<4x256xf32>
    %1 = vector.multi_reduction <add>, %0, %cst [0] : vector<2x4x256xf32> to vector<4x256xf32>
    %2 = vector.extract_strided_slice %1 {offsets = [0, 0], sizes = [4, 128], strides = [1, 1]} : vector<4x256xf32> to vector<4x128xf32>
    %3 = vector.extract_strided_slice %1 {offsets = [0, 128], sizes = [4, 128], strides = [1, 1]} : vector<4x256xf32> to vector<4x128xf32>
    %4 = arith.addf %2, %3 : vector<4x128xf32>
    %5 = arith.mulf %0, %0 : vector<2x4x256xf32>
    %cst_2 = arith.constant dense<0.000000e+00> : vector<4x256xf32>
    %6 = vector.multi_reduction <add>, %5, %cst_2 [0] : vector<2x4x256xf32> to vector<4x256xf32>
    %7 = vector.extract_strided_slice %6 {offsets = [0, 0], sizes = [4, 128], strides = [1, 1]} : vector<4x256xf32> to vector<4x128xf32>
    %8 = vector.extract_strided_slice %6 {offsets = [0, 128], sizes = [4, 128], strides = [1, 1]} : vector<4x256xf32> to vector<4x128xf32>
    %9 = arith.addf %7, %8 : vector<4x128xf32>
    %cst_3 = arith.constant dense<0.000000e+00> : vector<4xf32>
    %10 = vector.multi_reduction <add>, %4, %cst_3 [1] : vector<4x128xf32> to vector<4xf32>
    %11 = vector.shape_cast %10 : vector<4xf32> to vector<4x1xf32>
    %cst_4 = arith.constant 0.001953125 : f32
    %12 = vector.broadcast %cst_4 : f32 to vector<4x1xf32>
    %13 = arith.mulf %11, %12 : vector<4x1xf32>
    %cst_5 = arith.constant dense<0.000000e+00> : vector<4xf32>
    %14 = vector.multi_reduction <add>, %9, %cst_5 [1] : vector<4x128xf32> to vector<4xf32>
    %15 = vector.shape_cast %14 : vector<4xf32> to vector<4x1xf32>
    %cst_6 = arith.constant 0.001953125 : f32
    %16 = vector.broadcast %cst_6 : f32 to vector<4x1xf32>
    %17 = arith.mulf %15, %16 : vector<4x1xf32>
    %18 = arith.mulf %13, %13 : vector<4x1xf32>
    %19 = arith.subf %17, %18 : vector<4x1xf32>
    %cst_7 = arith.constant 9.99999974E-6 : f32
    %20 = vector.broadcast %cst_7 : f32 to vector<4x1xf32>
    %21 = arith.addf %19, %20 : vector<4x1xf32>
    %22 = math.rsqrt %21 : vector<4x1xf32>
    %c0_8 = arith.constant 0 : index
    %c0_9 = arith.constant 0 : index
    %23 = vector.load %arg2[%c0_8, %c0_9] : memref<4x1xf32, #tpu.memory_space<vmem>>, vector<4x1xf32>
    %24 = arith.mulf %23, %22 : vector<4x1xf32>
    %c0_10 = arith.constant 0 : index
    %c0_11 = arith.constant 0 : index
    %25 = vector.load %arg3[%c0_10, %c0_11] : memref<4x1xf32, #tpu.memory_space<vmem>>, vector<4x1xf32>
    %26 = arith.mulf %13, %24 : vector<4x1xf32>
    %27 = arith.subf %25, %26 : vector<4x1xf32>
    %28 = vector.shape_cast %24 : vector<4x1xf32> to vector<1x4x1xf32>
    %29 = vector.broadcast %28 : vector<1x4x1xf32> to vector<2x4x256xf32>
    %30 = arith.mulf %0, %29 : vector<2x4x256xf32>
    %31 = vector.shape_cast %27 : vector<4x1xf32> to vector<1x4x1xf32>
    %32 = vector.broadcast %31 : vector<1x4x1xf32> to vector<2x4x256xf32>
    %33 = arith.addf %30, %32 : vector<2x4x256xf32>
    %c0_12 = arith.constant 0 : index
    %c0_13 = arith.constant 0 : index
    %c0_14 = arith.constant 0 : index
    %34 = vector.load %arg6[%c0_12, %c0_13, %c0_14] : memref<2x4x256xf32, #tpu.memory_space<vmem>>, vector<2x4x256xf32>
    tpu.vector_store %arg6[%c0_12, %c0_13, %c0_14], %33 {strides = array<i32>} : memref<2x4x256xf32, #tpu.memory_space<vmem>>, vector<2x4x256xf32>,
    %c0_15 = arith.constant 0 : index
    %c0_16 = arith.constant 0 : index
    %35 = vector.load %arg4[%c0_15, %c0_16] : memref<4x1xf32, #tpu.memory_space<vmem>>, vector<4x1xf32>
    %cst_17 = arith.constant 0.899999976 : f32
    %36 = vector.broadcast %cst_17 : f32 to vector<4x1xf32>
    %37 = arith.mulf %36, %35 : vector<4x1xf32>
    %cst_18 = arith.constant 1.000000e-01 : f32
    %38 = vector.broadcast %cst_18 : f32 to vector<4x1xf32>
    %39 = arith.mulf %38, %13 : vector<4x1xf32>
    %40 = arith.addf %37, %39 : vector<4x1xf32>
    %c0_19 = arith.constant 0 : index
    %c0_20 = arith.constant 0 : index
    %41 = vector.load %arg7[%c0_19, %c0_20] : memref<4x1xf32, #tpu.memory_space<vmem>>, vector<4x1xf32>
    tpu.vector_store %arg7[%c0_19, %c0_20], %40 {strides = array<i32>} : memref<4x1xf32, #tpu.memory_space<vmem>>, vector<4x1xf32>,
    %c0_21 = arith.constant 0 : index
    %c0_22 = arith.constant 0 : index
    %42 = vector.load %arg5[%c0_21, %c0_22] : memref<4x1xf32, #tpu.memory_space<vmem>>, vector<4x1xf32>
    %cst_23 = arith.constant 0.899999976 : f32
    %43 = vector.broadcast %cst_23 : f32 to vector<4x1xf32>
    %44 = arith.mulf %43, %42 : vector<4x1xf32>
    %cst_24 = arith.constant 1.000000e-01 : f32
    %45 = vector.broadcast %cst_24 : f32 to vector<4x1xf32>
    %46 = arith.mulf %45, %19 : vector<4x1xf32>
    %47 = arith.addf %44, %46 : vector<4x1xf32>
    %c0_25 = arith.constant 0 : index
    %c0_26 = arith.constant 0 : index
    %48 = vector.load %arg8[%c0_25, %c0_26] : memref<4x1xf32, #tpu.memory_space<vmem>>, vector<4x1xf32>
    tpu.vector_store %arg8[%c0_25, %c0_26], %47 {strides = array<i32>} : memref<4x1xf32, #tpu.memory_space<vmem>>, vector<4x1xf32>,
    return
  }
  func.func @transform_0(%arg0: i32) -> (i32, i32, i32) {
    %c0_i32 = arith.constant 0 : i32
    %c0_i32_0 = arith.constant 0 : i32
    %c0_i32_1 = arith.constant 0 : i32
    %c0_i32_2 = arith.constant 0 : i32
    return %c0_i32, %c0_i32_0, %c0_i32_1 : i32, i32, i32
  }
  func.func @transform_1(%arg0: i32) -> (i32, i32) {
    %c0_i32 = arith.constant 0 : i32
    %c0_i32_0 = arith.constant 0 : i32
    %c0_i32_1 = arith.constant 0 : i32
    return %c0_i32, %c0_i32_0 : i32, i32
  }
  func.func @transform_2(%arg0: i32) -> (i32, i32) {
    %c0_i32 = arith.constant 0 : i32
    %c0_i32_0 = arith.constant 0 : i32
    %c0_i32_1 = arith.constant 0 : i32
    return %c0_i32, %c0_i32_0 : i32, i32
  }
  func.func @transform_3(%arg0: i32) -> (i32, i32) {
    %c0_i32 = arith.constant 0 : i32
    %c0_i32_0 = arith.constant 0 : i32
    %c0_i32_1 = arith.constant 0 : i32
    return %c0_i32, %c0_i32_0 : i32, i32
  }
  func.func @transform_4(%arg0: i32) -> (i32, i32) {
    %c0_i32 = arith.constant 0 : i32
    %c0_i32_0 = arith.constant 0 : i32
    %c0_i32_1 = arith.constant 0 : i32
    return %c0_i32, %c0_i32_0 : i32, i32
  }
  func.func @transform_5(%arg0: i32) -> (i32, i32, i32) {
    %c0_i32 = arith.constant 0 : i32
    %c0_i32_0 = arith.constant 0 : i32
    %c0_i32_1 = arith.constant 0 : i32
    %c0_i32_2 = arith.constant 0 : i32
    return %c0_i32, %c0_i32_0, %c0_i32_1 : i32, i32, i32
  }
  func.func @transform_6(%arg0: i32) -> (i32, i32) {
    %c0_i32 = arith.constant 0 : i32
    %c0_i32_0 = arith.constant 0 : i32
    %c0_i32_1 = arith.constant 0 : i32
    return %c0_i32, %c0_i32_0 : i32, i32
  }
  func.func @transform_7(%arg0: i32) -> (i32, i32) {
    %c0_i32 = arith.constant 0 : i32
    %c0_i32_0 = arith.constant 0 : i32
    %c0_i32_1 = arith.constant 0 : i32
    return %c0_i32, %c0_i32_0 : i32, i32
  }
}

</mosaic_0001>

<llo_original>
// kernel: batch_norm_pallas.1
$region0: #{batch_norm_pallas.1}
  #allocation0 [shape = 'u32[]', space=smem, size = 0x4, offset = 0x4, fixed_abs, tag = 'smem constant byte address 0x4 - core index']
  #allocation1 [shape = 'u32[72,128]{1,0:T(1,128)}', space=vmem, size = 0x9000, scoped, tag = 'internal scratch']
  %s0 = inlined_call_operand.vmem [shape: f32[2,4,256], index: 0, kind: input, shape index: {}]
  %s1 = inlined_call_operand.vmem [shape: f32[4,1], index: 1, kind: input, shape index: {}]
  %s2 = inlined_call_operand.vmem [shape: f32[4,1], index: 2, kind: input, shape index: {}]
  %s3 = inlined_call_operand.vmem [shape: f32[4,1], index: 3, kind: input, shape index: {}]
  %s4 = inlined_call_operand.vmem [shape: f32[4,1], index: 4, kind: input, shape index: {}]
  %s5 = inlined_call_operand.vmem [shape: f32[2,4,256], index: 5, kind: output, shape index: {0}]
  %s6 = inlined_call_operand.vmem [shape: f32[4,1], index: 6, kind: output, shape index: {1}]
  %s7 = inlined_call_operand.vmem [shape: f32[4,1], index: 7, kind: output, shape index: {2}]
  %8 = xla_tuple %s5, %s6, %s7
  %s9 = sld [smem:[#allocation0]]
  $region46: #{batch_norm_pallas.1} parent=0
    _
  %s11 = ssub.s32 1, %s9
  %s12 = scalar_select 0, %s11, %s9
  // Predicated region
  $region2: #{batch_norm_pallas.1} parent=0 // pred_check
    _
  $region3: #{batch_norm_pallas.1} parent=0 // pred_check_branch
    %14 = sbr.rel (0) target = $region5
  $region4: #{batch_norm_pallas.1} parent=0 // pred_region
    _
  $region5: #{batch_norm_pallas.1} parent=0 // pred_fallthru
    _
  // Predicated region
  $region6: #{batch_norm_pallas.1} parent=0 // pred_check
    _
  $region7: #{batch_norm_pallas.1} parent=0 // pred_check_branch
    %16 = sbr.rel (0) target = $region9
  $region8: #{batch_norm_pallas.1} parent=0 // pred_region
    _
  $region9: #{batch_norm_pallas.1} parent=0 // pred_fallthru
    _
  // Predicated region
  $region10: #{batch_norm_pallas.1} parent=0 // pred_check
    _
  $region11: #{batch_norm_pallas.1} parent=0 // pred_check_branch
    %18 = sbr.rel (0) target = $region13
  $region12: #{batch_norm_pallas.1} parent=0 // pred_region
    _
  $region13: #{batch_norm_pallas.1} parent=0 // pred_fallthru
    _
  // Predicated region
  $region14: #{batch_norm_pallas.1} parent=0 // pred_check
    _
  $region15: #{batch_norm_pallas.1} parent=0 // pred_check_branch
    %20 = sbr.rel (0) target = $region17
  $region16: #{batch_norm_pallas.1} parent=0 // pred_region
    _
  $region17: #{batch_norm_pallas.1} parent=0 // pred_fallthru
    _
  // Predicated region
  $region18: #{batch_norm_pallas.1} parent=0 // pred_check
    _
  $region19: #{batch_norm_pallas.1} parent=0 // pred_check_branch
    %22 = sbr.rel (0) target = $region21
  $region20: #{batch_norm_pallas.1} parent=0 // pred_region
    _
  $region21: #{batch_norm_pallas.1} parent=0 // pred_fallthru
    _
  %v23 = vld [vmem:[%s0] sm:$0xff]
  %v24 = vld [vmem:[%s0 + $0x8] sm:$0xff]
  %27 = vst [vmem:[#allocation1] ss:$2 sm:$0xff] %v23
  %v28 = vld.sshfl [vmem:[#allocation1] sm:$0xff pattern:$0x75316420]
  %v29 = vld.sshfl [vmem:[#allocation1 + $0x8] sm:$0xff pattern:$0x75316420]
  %s30 = scalar_lea.vmem [#allocation1], 16
  %31 = vst [vmem:[%s30] ss:$2 sm:$0xff] %v24
  %v32 = vld.sshfl [vmem:[#allocation1 + $0x10] sm:$0xff pattern:$0x75316420]
  %v33 = vld.sshfl [vmem:[#allocation1 + $0x18] sm:$0xff pattern:$0x75316420]
  %vm38 = vcmask 1043456
  %v39 = vsel %vm38, %v28, 0.0
  %v40 = vsel %vm38, %v32, 0.0
  %v41 = vadd.f32 %v39, %v40
  %v42 = vsel %vm38, %v29, 0.0
  %v43 = vsel %vm38, %v33, 0.0
  %v44 = vadd.f32 %v42, %v43
  %v45 = vadd.f32 %v41, %v44
  %v46 = vmul.f32 %v23, %v23
  %v47 = vmul.f32 %v24, %v24
  %50 = vst [vmem:[#allocation1] ss:$2 sm:$0xff] %v46
  %v51 = vld.sshfl [vmem:[#allocation1] sm:$0xff pattern:$0x75316420]
  %v52 = vld.sshfl [vmem:[#allocation1 + $0x8] sm:$0xff pattern:$0x75316420]
  %s53 = scalar_lea.vmem [#allocation1], 16
  %54 = vst [vmem:[%s53] ss:$2 sm:$0xff] %v47
  %v55 = vld.sshfl [vmem:[#allocation1 + $0x10] sm:$0xff pattern:$0x75316420]
  %v56 = vld.sshfl [vmem:[#allocation1 + $0x18] sm:$0xff pattern:$0x75316420]
  %v61 = vsel %vm38, %v51, 0.0
  %v62 = vsel %vm38, %v55, 0.0
  %v63 = vadd.f32 %v61, %v62
  %v64 = vsel %vm38, %v52, 0.0
  %v65 = vsel %vm38, %v56, 0.0
  %v66 = vadd.f32 %v64, %v65
  %v67 = vadd.f32 %v63, %v66
  %v68 = vsel %vm38, %v45, 0.0
  %69 = vadd.xlane.f32.xlu0 %v68
  %v70 = vpop.xlane.xlu0 %69
  %v71 = vmul.f32 %v70, 0.001953125
  %v72 = vsel %vm38, %v67, 0.0
  %73 = vadd.xlane.f32.xlu0 %v72
  %v74 = vpop.xlane.xlu0 %73
  %v75 = vmul.f32 %v74, 0.001953125
  %v76 = vmul.f32 %v71, %v71
  %v77 = vsub.f32 %v75, %v76
  %v78 = vadd.f32 %v77, 1e-05
  %v79 = vrsqrt.pop %v78
  %v80 = vmul.f32 %v79, %v78
  %v81 = vmul.f32 %v80, %v79
  %v82 = vmul.f32 0.5, %v81
  %v83 = vsub.f32 1.5, %v82
  %v84 = vmul.f32 %v79, %v83
  %vm85 = vweird.f32 %v78
  %vm86 = vweird.f32 %v79
  %vm87 = vmor %vm85, %vm86
  %v88 = vsel %vm87, %v79, %v84
  %v89 = vld [vmem:[%s1] sm:$0xf]
  %v90 = vmul.f32 %v89, %v88
  %v91 = vld [vmem:[%s2] sm:$0xf]
  %v92 = vmul.f32 %v71, %v90
  %v93 = vsub.f32 %v91, %v92
  %95 = vset.pattern.permute.xlu0 0
  %96 = vperm.xlu0 %95, %v90
  %v97 = vpop.permute.xlu0 %96
  %v99 = vunpack.c.l.s4 839922192
  %v100 = vunpack.c.0.s8 %v99
  %v101 = vperm.slane %v97, %v100
  %v103 = vmul.f32 %v23, %v101
  %v104 = vmul.f32 %v24, %v101
  %106 = vset.pattern.permute.xlu0 0
  %107 = vperm.xlu0 %106, %v93
  %v108 = vpop.permute.xlu0 %107
  %v110 = vunpack.c.l.s4 839922192
  %v111 = vunpack.c.0.s8 %v110
  %v112 = vperm.slane %v108, %v111
  %v114 = vadd.f32 %v103, %v112
  %v115 = vadd.f32 %v104, %v112
  %116 = vst [vmem:[%s5] sm:$0xff] %v114
  %117 = vst [vmem:[%s5 + $0x8] sm:$0xff] %v115
  %v118 = vld [vmem:[%s3] sm:$0xf]
  %v119 = vmul.f32 %v118, 0.9
  %v120 = vmul.f32 %v71, 0.1
  %v121 = vadd.f32 %v119, %v120
  %vm122 = vcmask 3072
  %123 = vst.msk [vmem:[%s6] sm:$0xf] %vm122, %v121
  %v124 = vld [vmem:[%s4] sm:$0xf]
  %v125 = vmul.f32 %v124, 0.9
  %v126 = vmul.f32 %v77, 0.1
  %v127 = vadd.f32 %v125, %v126
  %128 = vst.msk [vmem:[%s7] sm:$0xf] %vm122, %v127
  // Predicated region
  $region22: #{batch_norm_pallas.1} parent=0 // pred_check
    _
  $region23: #{batch_norm_pallas.1} parent=0 // pred_check_branch
    %130 = sbr.rel (0) target = $region25
  $region24: #{batch_norm_pallas.1} parent=0 // pred_region
    _
  $region25: #{batch_norm_pallas.1} parent=0 // pred_fallthru
    _
  // Predicated region
  $region26: #{batch_norm_pallas.1} parent=0 // pred_check
    _
  $region27: #{batch_norm_pallas.1} parent=0 // pred_check_branch
    %132 = sbr.rel (0) target = $region29
  $region28: #{batch_norm_pallas.1} parent=0 // pred_region
    _
  $region29: #{batch_norm_pallas.1} parent=0 // pred_fallthru
    _
  // Predicated region
  $region30: #{batch_norm_pallas.1} parent=0 // pred_check
    _
  $region31: #{batch_norm_pallas.1} parent=0 // pred_check_branch
    %134 = sbr.rel (0) target = $region33
  $region32: #{batch_norm_pallas.1} parent=0 // pred_region
    _
  $region33: #{batch_norm_pallas.1} parent=0 // pred_fallthru
    _
  // Predicated region
  $region34: #{batch_norm_pallas.1} parent=0 // pred_check
    _
  $region35: #{batch_norm_pallas.1} parent=0 // pred_check_branch
    %136 = sbr.rel (0) target = $region37
  $region36: #{batch_norm_pallas.1} parent=0 // pred_region
    _
  $region37: #{batch_norm_pallas.1} parent=0 // pred_fallthru
    _
  // Predicated region
  $region38: #{batch_norm_pallas.1} parent=0 // pred_check
    _
  $region39: #{batch_norm_pallas.1} parent=0 // pred_check_branch
    %138 = sbr.rel (0) target = $region41
  $region40: #{batch_norm_pallas.1} parent=0 // pred_region
    _
  $region41: #{batch_norm_pallas.1} parent=0 // pred_fallthru
    _
  // Predicated region
  $region42: #{batch_norm_pallas.1} parent=0 // pred_check
    _
  $region43: #{batch_norm_pallas.1} parent=0 // pred_check_branch
    %140 = sbr.rel (0) target = $region45
  $region44: #{batch_norm_pallas.1} parent=0 // pred_region
    _
  $region45: #{batch_norm_pallas.1} parent=0 // pred_fallthru
    _

</llo_original>
